<compile_context>
chip_gen: v5e
topology: v5e:2x2
jax: 0.10.0
libtpu: 0.0.40
codegen_flags: <defaults>
</compile_context>

<pallas_src>
import jax
import jax.numpy as jnp
from jax.experimental import pallas as pl
from jax.experimental.pallas import tpu as pltpu


def _patch_embed_kernel(x_ref, w_ref, b_ref, o_ref):
    # x_ref: (TM, K)   w_ref: (K, E)   b_ref: (1, E)   o_ref: (TM, E)
    acc = jnp.dot(x_ref[...], w_ref[...], preferred_element_type=jnp.float32)
    o_ref[...] = (acc + b_ref[...].astype(jnp.float32)).astype(o_ref.dtype)


def feat_embedder(seq, weight, bias, *, patch_len, stride=None):
    """Pallas equivalent of FeatEmbedder.forward.

    seq:    (b, c, n)                   input signal
    weight: (embed_dim, c, patch_len)   Conv1d weight (torch layout)
    bias:   (embed_dim,)
    returns (b, n_patches, embed_dim)
    """
    stride = patch_len if stride is None else stride
    b, c, n = seq.shape
    embed_dim, wc, wk = weight.shape
    assert wc == c and wk == patch_len

    n_patches = (n - patch_len) // stride + 1

    # ---- im2col (layout plumbing only; zero-copy reshape for default stride).
    if stride == patch_len:
        x = seq[:, :, : n_patches * patch_len].reshape(b, c, n_patches, patch_len)
    else:
        # TODO(synk): overlapping-stride path uses a wrapper-side gather; could
        # be fused in-kernel with a strided BlockSpec if ever needed.
        idx = (stride * jnp.arange(n_patches)[:, None]
               + jnp.arange(patch_len)[None, :]).reshape(-1)
        x = jnp.take(seq, idx, axis=2).reshape(b, c, n_patches, patch_len)

    # (b, n_patches, c, patch_len) -> rows of length K = c*patch_len, ordered
    # (c, k) to match the flattened torch Conv1d weight layout.
    x = x.transpose(0, 2, 1, 3).reshape(b * n_patches, c * patch_len)

    w = weight.reshape(embed_dim, c * patch_len).T          # (K, E)
    bias2d = bias.reshape(1, embed_dim)                     # (1, E)

    M, K = x.shape
    E = embed_dim
    out_dtype = seq.dtype

    # ---- row tiling: full block for small problems, 512-row tiles otherwise.
    TM = M if M <= 512 else 512
    M_pad = ((M + TM - 1) // TM) * TM
    if M_pad != M:
        x = jnp.pad(x, ((0, M_pad - M), (0, 0)))

    itemsize = jnp.dtype(out_dtype).itemsize
    out = pl.pallas_call(
        _patch_embed_kernel,
        out_shape=jax.ShapeDtypeStruct((M_pad, E), out_dtype),
        grid=(M_pad // TM,),
        in_specs=[
            pl.BlockSpec((TM, K), lambda i: (i, 0)),
            pl.BlockSpec((K, E), lambda i: (0, 0)),   # weight resident across tiles
            pl.BlockSpec((1, E), lambda i: (0, 0)),   # bias resident across tiles
        ],
        out_specs=pl.BlockSpec((TM, E), lambda i: (i, 0)),
        compiler_params=pltpu.CompilerParams(
            dimension_semantics=("parallel",)),
        cost_estimate=pl.CostEstimate(
            flops=2 * M_pad * K * E,
            transcendentals=0,
            bytes_accessed=(M_pad * K + K * E + E + M_pad * E) * itemsize),
    )(x, w, bias2d)

    return out[:M].reshape(b, n_patches, embed_dim)


def _reference(seq, weight, bias, *, patch_len, stride=None):
    """Pure-JAX reference mirroring the PyTorch forward (Conv1d + rearrange)."""
    stride = patch_len if stride is None else stride
    out = jax.lax.conv_general_dilated(
        seq, weight, window_strides=(stride,), padding="VALID",
        dimension_numbers=("NCH", "OIH", "NCH"),
        precision=jax.lax.Precision.HIGHEST)
    out = out + bias[None, :, None]
    return jnp.transpose(out, (0, 2, 1))


if __name__ == "__main__":
    key = jax.random.PRNGKey(0)
    k_seq, k_w, k_b = jax.random.split(key, 3)

    b, c, n = 2, 4, 64
    patch_len, embed_dim = 8, 32          # -> n_patches = 8

    seq = jax.random.normal(k_seq, (b, c, n), dtype=jnp.float32)
    fan_in = c * patch_len
    weight = jax.random.normal(k_w, (embed_dim, c, patch_len), jnp.float32) / jnp.sqrt(fan_in)
    bias = jax.random.normal(k_b, (embed_dim,), jnp.float32) * 0.01

    out = feat_embedder(seq, weight, bias, patch_len=patch_len)
    out = jax.block_until_ready(out)

    ref = _reference(seq, weight, bias, patch_len=patch_len)
    assert out.shape == (b, n // patch_len, embed_dim), out.shape
    assert out.dtype == seq.dtype
    assert jnp.allclose(out, ref, atol=1e-4, rtol=1e-4), "mismatch vs reference"

    print("KERNEL_OK")
</pallas_src>

<mosaic_0001>
module attributes {stable_mosaic.version = 11 : i64} {
  func.func @_patch_embed_kernel(%arg0: i32, %arg1: memref<16x32xf32, #tpu.memory_space<vmem>>, %arg2: memref<32x32xf32, #tpu.memory_space<vmem>>, %arg3: memref<1x32xf32, #tpu.memory_space<vmem>>, %arg4: memref<16x32xf32, #tpu.memory_space<vmem>>) attributes {dimension_semantics = [#tpu.dimension_semantics<parallel>], iteration_bounds = array<i64: 1>, scalar_prefetch = 0 : i64, scratch_operands = 0 : i64, tpu.core_type = #tpu.core_type<tc>, window_params = [{transform_indices = @transform_0, window_bounds = array<i64: 16, 32>}, {pipeline_mode = #tpu.pipeline_mode<synchronous>, transform_indices = @transform_1, window_bounds = array<i64: 32, 32>}, {pipeline_mode = #tpu.pipeline_mode<synchronous>, transform_indices = @transform_2, window_bounds = array<i64: 1, 32>}, {transform_indices = @transform_3, window_bounds = array<i64: 16, 32>}]} {
    %c0 = arith.constant 0 : index
    %c0_0 = arith.constant 0 : index
    %0 = vector.load %arg1[%c0, %c0_0] : memref<16x32xf32, #tpu.memory_space<vmem>>, vector<16x32xf32>
    %c0_1 = arith.constant 0 : index
    %c0_2 = arith.constant 0 : index
    %1 = vector.load %arg2[%c0_1, %c0_2] : memref<32x32xf32, #tpu.memory_space<vmem>>, vector<32x32xf32>
    %cst = arith.constant dense<0.000000e+00> : vector<16x32xf32>
    %2 = tpu.matmul %0, %1, %cst {dimension_numbers = #tpu.dot_dimension_numbers<[1], [0], [0], [1], [0, 0, 1, 1], [], []>} : vector<16x32xf32>, vector<32x32xf32>, vector<16x32xf32> -> vector<16x32xf32>
    %c0_3 = arith.constant 0 : index
    %c0_4 = arith.constant 0 : index
    %3 = vector.load %arg3[%c0_3, %c0_4] : memref<1x32xf32, #tpu.memory_space<vmem>>, vector<1x32xf32>
    %4 = vector.broadcast %3 : vector<1x32xf32> to vector<16x32xf32>
    %5 = arith.addf %2, %4 : vector<16x32xf32>
    %c0_5 = arith.constant 0 : index
    %c0_6 = arith.constant 0 : index
    %6 = vector.load %arg4[%c0_5, %c0_6] : memref<16x32xf32, #tpu.memory_space<vmem>>, vector<16x32xf32>
    tpu.vector_store %arg4[%c0_5, %c0_6], %5 {strides = array<i32>} : memref<16x32xf32, #tpu.memory_space<vmem>>, vector<16x32xf32>,
    return
  }
  func.func @transform_0(%arg0: i32) -> (i32, i32) {
    %c0_i32 = arith.constant 0 : i32
    %c0_i32_0 = arith.constant 0 : i32
    return %arg0, %c0_i32 : i32, i32
  }
  func.func @transform_1(%arg0: i32) -> (i32, i32) {
    %c0_i32 = arith.constant 0 : i32
    %c0_i32_0 = arith.constant 0 : i32
    %c0_i32_1 = arith.constant 0 : i32
    return %c0_i32, %c0_i32_0 : i32, i32
  }
  func.func @transform_2(%arg0: i32) -> (i32, i32) {
    %c0_i32 = arith.constant 0 : i32
    %c0_i32_0 = arith.constant 0 : i32
    %c0_i32_1 = arith.constant 0 : i32
    return %c0_i32, %c0_i32_0 : i32, i32
  }
  func.func @transform_3(%arg0: i32) -> (i32, i32) {
    %c0_i32 = arith.constant 0 : i32
    %c0_i32_0 = arith.constant 0 : i32
    return %arg0, %c0_i32 : i32, i32
  }
}

</mosaic_0001>

<llo_original>
// kernel: tpu_custom_call.1
$region0: #{tpu_custom_call.1}
  #allocation0 [shape = 'u32[]', space=smem, size = 0x4, offset = 0x4, fixed_abs, tag = 'smem constant byte address 0x4 - core index']
  #allocation1 [shape = 'u32[72,128]{1,0:T(1,128)}', space=vmem, size = 0x9000, scoped, tag = 'internal scratch']
  %s0 = inlined_call_operand.hbm [shape: f32[16,32], index: 0, kind: input, shape index: {}]
  %s1 = inlined_call_operand.hbm [shape: f32[32,32], index: 1, kind: input, shape index: {}]
  %s2 = inlined_call_operand.vmem [shape: f32[1,32], index: 2, kind: input, shape index: {}]
  %s3 = inlined_call_operand.hbm [shape: f32[16,32], index: 3, kind: output, shape index: {}]
  %s4 = sld [smem:[#allocation0]]
  $region30: #{tpu_custom_call.1} parent=0
    _
  %s6 = ssub.s32 1, %s4
  %s7 = scalar_select 0, %s6, %s4
  $region1: #{tpu_custom_call.1} parent=0
    #allocation2 [shape = 'u8[8192]{0}', space=vmem, size = 0x2000, scoped, tag = 'input window, operand 0, single buffered']
    #allocation3 [shape = 's32[1]{0}', space=sflag, size = 0x4, scoped, tag = 'scoped memory for tpu_custom_call.1']
    #allocation4 [shape = 's32[1]{0}', space=sflag, size = 0x4, scoped, tag = 'scoped memory for tpu_custom_call.1']
    #allocation5 [shape = 'u8[16384]{0}', space=vmem, size = 0x4000, scoped, tag = 'input window, operand 1, single buffered']
    #allocation6 [shape = 's32[1]{0}', space=sflag, size = 0x4, scoped, tag = 'scoped memory for tpu_custom_call.1']
    #allocation7 [shape = 'u8[8192]{0}', space=vmem, size = 0x2000, scoped, tag = 'output window, operand 0, single buffered']
    %8 = vsyncpa [#allocation3], 0
    %9 = vsyncpa [#allocation6], 0
    %10 = vsyncpa [#allocation4], 0
    // Predicated region
    $region2: #{tpu_custom_call.1} parent=1 // pred_check
      _
    $region3: #{tpu_custom_call.1} parent=1 // pred_check_branch
      %12 = sbr.rel (0) target = $region5
    $region4: #{tpu_custom_call.1} parent=1 // pred_region
      %14 = vsyncadd [#allocation3], 0
      %s15 = sshll.u32 %s0, 4
      %s16 = int_to_ptr.hbm [resolvable:$true] %s15
      %s17 = sshll.u32 [#allocation2], 4
      %s18 = int_to_ptr.vmem [resolvable:$true] %s17
      %23 = dma.hbm_to_vmem [thread:$0]  %s16, 256, %s18, [#allocation3], 128, 128, 8
    $region5: #{tpu_custom_call.1} parent=1 // pred_fallthru
      _
    // Predicated region
    $region6: #{tpu_custom_call.1} parent=1 // pred_check
      _
    $region7: #{tpu_custom_call.1} parent=1 // pred_check_branch
      %25 = sbr.rel (0) target = $region9
    $region8: #{tpu_custom_call.1} parent=1 // pred_region
      %27 = vsyncadd [#allocation6], 0
      %s28 = sshll.u32 %s1, 4
      %s29 = int_to_ptr.hbm [resolvable:$true] %s28
      %s30 = sshll.u32 [#allocation5], 4
      %s31 = int_to_ptr.vmem [resolvable:$true] %s30
      %36 = dma.hbm_to_vmem [thread:$0]  %s29, 512, %s31, [#allocation6], 128, 128, 8
    $region9: #{tpu_custom_call.1} parent=1 // pred_fallthru
      _
    // Predicated region
    $region10: #{tpu_custom_call.1} parent=1 // pred_check
      _
    $region11: #{tpu_custom_call.1} parent=1 // pred_check_branch
      %38 = sbr.rel (0) target = $region13
    $region12: #{tpu_custom_call.1} parent=1 // pred_region
      _
    $region13: #{tpu_custom_call.1} parent=1 // pred_fallthru
      _
    // Predicated region
    $region14: #{tpu_custom_call.1} parent=1 // pred_check
      _
    $region15: #{tpu_custom_call.1} parent=1 // pred_check_branch
      %40 = sbr.rel (0) target = $region17
    $region16: #{tpu_custom_call.1} parent=1 // pred_region
      %42 = dma.done [#allocation3], 256
    $region17: #{tpu_custom_call.1} parent=1 // pred_fallthru
      _
    // Predicated region
    $region18: #{tpu_custom_call.1} parent=1 // pred_check
      _
    $region19: #{tpu_custom_call.1} parent=1 // pred_check_branch
      %44 = sbr.rel (0) target = $region21
    $region20: #{tpu_custom_call.1} parent=1 // pred_region
      %46 = dma.done [#allocation6], 512
    $region21: #{tpu_custom_call.1} parent=1 // pred_fallthru
      _
    %v47 = vld [vmem:[#allocation2] sm:$0xff]
    %v48 = vld [vmem:[#allocation2 + $0x8] sm:$0xff]
    %v49 = vld [vmem:[#allocation5] sm:$0xff]
    %v50 = vld [vmem:[#allocation5 + $0x8] sm:$0xff]
    %v51 = vld [vmem:[#allocation5 + $0x10] sm:$0xff]
    %v52 = vld [vmem:[#allocation5 + $0x18] sm:$0xff]
    %v53 = vld [vmem:[%s2] sm:$0x1]
    %v55 = vperm.slane %v53, 0
    %vm57 = vcmask 261120
    %v59 = vsel %vm57, %v47, 0
    %v62 = vsel %vm57, %v48, 0
    %64 = vmatpush.msra.mxu0 0.0
    %65 = vmatpush.msra.mxu0 0.0
    %66 = vmatpush.msra.mxu0 0.0
    %67 = vmatpush.msra.mxu0 0.0
    %68 = vmatpush.msra.mxu0 0.0
    %69 = vmatpush.msra.mxu0 0.0
    %70 = vmatpush.msra.mxu0 0.0
    %71 = vmatpush.msra.mxu0 0.0
    %72 = vmatpush.msra.mxu0 0.0
    %73 = vmatpush.msra.mxu0 0.0
    %74 = vmatpush.msra.mxu0 0.0
    %75 = vmatpush.msra.mxu0 0.0
    %76 = vmatpush.msra.mxu0 %v52
    %77 = vmatpush.msra.mxu0 %v51
    %78 = vmatpush.msra.mxu0 %v50
    %79 = vmatpush.msra.mxu0 %v49
    %80 = vmatmul.f32.gmra.mxu0 %v59
    %v81 = vpop.f32.mrf.mxu0
    %v82 = vadd.f32 %v55, %v81
    %83 = vmatmul.f32.gmra.mxu0 %v62
    %v84 = vpop.f32.mrf.mxu0
    %v85 = vadd.f32 %v55, %v84
    %86 = vdwg.mxu0
    %87 = vst.msk [vmem:[#allocation7] sm:$0xff] %vm57, %v82
    %88 = vst.msk [vmem:[#allocation7 + $0x8] sm:$0xff] %vm57, %v85
    // Predicated region
    $region22: #{tpu_custom_call.1} parent=1 // pred_check
      _
    $region23: #{tpu_custom_call.1} parent=1 // pred_check_branch
      %90 = sbr.rel (0) target = $region25
    $region24: #{tpu_custom_call.1} parent=1 // pred_region
      %92 = vsyncadd [#allocation4], 0
      %s93 = sshll.u32 [#allocation7], 4
      %s94 = int_to_ptr.vmem [resolvable:$true] %s93
      %s95 = sshll.u32 %s3, 4
      %s96 = int_to_ptr.hbm [resolvable:$true] %s95
      %101 = dma.vmem_to_hbm [thread:$0]  %s94, 256, %s96, [#allocation4], 128, 128, 8
    $region25: #{tpu_custom_call.1} parent=1 // pred_fallthru
      _
    // Predicated region
    $region26: #{tpu_custom_call.1} parent=1 // pred_check
      _
    $region27: #{tpu_custom_call.1} parent=1 // pred_check_branch
      %103 = sbr.rel (0) target = $region29
    $region28: #{tpu_custom_call.1} parent=1 // pred_region
      %105 = dma.done [#allocation4], 256
    $region29: #{tpu_custom_call.1} parent=1 // pred_fallthru
      _
    %106 = vsyncpa [#allocation3], 1
    %107 = vsyncpa [#allocation6], 1
    %108 = vsyncpa [#allocation4], 1

</llo_original>
